<compile_context>
chip_gen: v5e
topology: v5e:2x2
jax: 0.10.0
libtpu: 0.0.40
codegen_flags: <defaults>
</compile_context>

<pallas_src>
import functools

import jax
import jax.numpy as jnp
from jax.experimental import pallas as pl
from jax.experimental.pallas import tpu as pltpu


# ---------------------------------------------------------------------------
# Kernel: one fused 3-matmul MLP covering both Q heads.
# ---------------------------------------------------------------------------
def _two_handed_fused_kernel(s_ref, a_ref, w0s_ref, w0a_ref, w1_ref, wq_ref,
                             b01_ref, bq_ref, out_ref):
    # layer 0: [states | actions] @ [W0s ; W0a] + b0, ReLU (split-K, no concat)
    h = jnp.dot(s_ref[...], w0s_ref[...], preferred_element_type=jnp.float32)
    h = h + jnp.dot(a_ref[...], w0a_ref[...], preferred_element_type=jnp.float32)
    h = jnp.maximum(h + b01_ref[0:1, :], 0.0)

    # layer 1: block-diagonal W1 keeps the two heads independent
    h = jnp.dot(h.astype(w1_ref.dtype), w1_ref[...],
                preferred_element_type=jnp.float32)
    h = jnp.maximum(h + b01_ref[1:2, :], 0.0)

    # output layer: narrow (128, 8) weights -> only 32 B/row written back
    q = jnp.dot(h.astype(wq_ref.dtype), wq_ref[...],
                preferred_element_type=jnp.float32)
    out_ref[...] = (q + bq_ref[...]).astype(out_ref.dtype)


def _round_up(x, m):
    return ((x + m - 1) // m) * m


# ---------------------------------------------------------------------------
# Wrapper
# ---------------------------------------------------------------------------
@functools.partial(jax.jit, static_argnames=("tile_b",))
def two_handed_net_forward(states, actions, packed_params, *, tile_b=2048):
    """JAX/Pallas equivalent of TwoHandedNet.forward(states, actions).

    `packed_params` = (w0s, w0a, w1, wq, b01, bq) from `pack_params`.
    Returns (q1, q2), each of shape (B, 1), like the PyTorch module.
    """
    w0s, w0a, w1, wq, b01, bq = packed_params
    B = states.shape[0]
    state_dim = states.shape[1]
    action_dim = actions.shape[1]
    out_w = wq.shape[1]          # narrow output width (8)

    compute_dtype = w0s.dtype
    states = states.astype(compute_dtype)
    actions = actions.astype(compute_dtype)

    # ---- batch tiling: multiple of 8 rows, aim for ~8 grid steps, pad batch.
    target_steps = 8
    tb_cap = _round_up(max(1, -(-B // target_steps)), 8)
    tb = max(8, (min(tile_b, tb_cap) // 8) * 8)
    b_pad = _round_up(B, tb)
    if b_pad != B:
        pad = b_pad - B
        states = jnp.pad(states, ((0, pad), (0, 0)))
        actions = jnp.pad(actions, ((0, pad), (0, 0)))
    grid = (b_pad // tb,)

    # ---- advisory cost estimate for the XLA scheduler
    weight_bytes = sum(int(x.size) * jnp.dtype(x.dtype).itemsize
                       for x in (w0s, w0a, w1, wq, b01, bq))
    in_bytes = b_pad * (state_dim + action_dim) * jnp.dtype(compute_dtype).itemsize
    out_bytes = b_pad * out_w * 4
    flops = 2 * b_pad * (w0s.shape[0] * w0s.shape[1]
                         + w0a.shape[0] * w0a.shape[1]
                         + w1.shape[0] * w1.shape[1]
                         + wq.shape[0] * wq.shape[1])
    cost = pl.CostEstimate(flops=flops, transcendentals=0,
                           bytes_accessed=in_bytes + out_bytes + weight_bytes)

    out = pl.pallas_call(
        _two_handed_fused_kernel,
        out_shape=jax.ShapeDtypeStruct((b_pad, out_w), jnp.float32),
        grid=grid,
        in_specs=[
            pl.BlockSpec((tb, state_dim), lambda i: (i, 0)),   # states tile
            pl.BlockSpec((tb, action_dim), lambda i: (i, 0)),  # actions tile
            pl.BlockSpec(w0s.shape, lambda i: (0, 0)),         # W0 (state rows)
            pl.BlockSpec(w0a.shape, lambda i: (0, 0)),         # W0 (action rows)
            pl.BlockSpec(w1.shape, lambda i: (0, 0)),          # block-diag W1
            pl.BlockSpec(wq.shape, lambda i: (0, 0)),          # narrow WQ
            pl.BlockSpec(b01.shape, lambda i: (0, 0)),         # biases (2, 128)
            pl.BlockSpec(bq.shape, lambda i: (0, 0)),          # output bias (1, 8)
        ],
        out_specs=pl.BlockSpec((tb, out_w), lambda i: (i, 0)),
        compiler_params=pltpu.CompilerParams(
            dimension_semantics=("parallel",),
            vmem_limit_bytes=32 * 1024 * 1024),
        cost_estimate=cost,
    )(states, actions, w0s, w0a, w1, wq, b01, bq)

    q1 = out[:B, 0:1]
    q2 = out[:B, 1:2]
    return q1, q2


# ---------------------------------------------------------------------------
# Parameter init (mirrors nn.Linear default init) and fusion/packing.
# Weights are stored as (in_features, out_features), i.e. transposed relative
# to PyTorch's nn.Linear.weight, so the kernel computes y = x @ W + b.
# ---------------------------------------------------------------------------
def init_linear(key, in_dim, out_dim):
    kw, kb = jax.random.split(key)
    bound = 1.0 / jnp.sqrt(jnp.float32(in_dim))
    w = jax.random.uniform(kw, (in_dim, out_dim), jnp.float32, -bound, bound)
    b = jax.random.uniform(kb, (1, out_dim), jnp.float32, -bound, bound)
    return w, b


def init_two_handed_net(key, input_dim, hidden_dims=(64, 64)):
    keys = jax.random.split(key, 6)
    w10, b10 = init_linear(keys[0], input_dim, hidden_dims[0])
    w11, b11 = init_linear(keys[1], hidden_dims[0], hidden_dims[1])
    wq1, bq1 = init_linear(keys[2], hidden_dims[1], 1)
    w20, b20 = init_linear(keys[3], input_dim, hidden_dims[0])
    w21, b21 = init_linear(keys[4], hidden_dims[0], hidden_dims[1])
    wq2, bq2 = init_linear(keys[5], hidden_dims[1], 1)
    return (w10, b10, w11, b11, wq1, bq1,
            w20, b20, w21, b21, wq2, bq2)


def pack_params(params, state_dim, hidden_dims=(64, 64), out_width=8,
                dtype=jnp.float32):
    """Fuse the 12 per-head tensors into 6 arrays consumed by the kernel.

    `dtype` controls the matmul-input precision (e.g. jnp.bfloat16 on v6e/v7x
    for higher MXU throughput); accumulation and biases stay fp32.
    """
    (w10, b10, w11, b11, wq1, bq1,
     w20, b20, w21, b21, wq2, bq2) = params
    h0, h1 = hidden_dims
    assert h0 == h1, "packing assumes equal hidden widths (default (64, 64))"

    # Layer 0: concat heads along the output axis, split rows into state/action.
    w0 = jnp.concatenate([w10, w20], axis=1)              # (input_dim, 2*h0)
    w0s = w0[:state_dim, :].astype(dtype)
    w0a = w0[state_dim:, :].astype(dtype)
    b0 = jnp.concatenate([b10, b20], axis=1)               # (1, 2*h0)

    # Layer 1: block-diagonal so the heads stay independent.
    z = jnp.zeros((h0, h1), jnp.float32)
    w1 = jnp.block([[w11, z], [z, w21]]).astype(dtype)      # (2*h0, 2*h1)
    b1 = jnp.concatenate([b11, b21], axis=1)                # (1, 2*h1)

    # Output layer: NARROW packing (out_width columns, default 8).
    # Column 0 -> q1, column 1 -> q2, rest zero.
    wq = jnp.zeros((2 * h1, out_width), jnp.float32)
    wq = wq.at[:h1, 0:1].set(wq1)
    wq = wq.at[h1:, 1:2].set(wq2)
    wq = wq.astype(dtype)
    bq = jnp.zeros((1, out_width), jnp.float32)
    bq = bq.at[:, 0:1].set(bq1)
    bq = bq.at[:, 1:2].set(bq2)

    b01 = jnp.concatenate([b0, b1], axis=0)                  # (2, 2*h0), fp32
    return w0s, w0a, w1, wq, b01, bq


# ---------------------------------------------------------------------------
# Pure-JAX reference of the PyTorch forward (unfused), for correctness check.
# ---------------------------------------------------------------------------
def reference_forward(states, actions, params):
    (w10, b10, w11, b11, wq1, bq1,
     w20, b20, w21, b21, wq2, bq2) = params
    x = jnp.concatenate([states, actions], axis=1)
    h1 = jnp.maximum(x @ w10 + b10, 0.0)
    h1 = jnp.maximum(h1 @ w11 + b11, 0.0)
    q1 = h1 @ wq1 + bq1
    h2 = jnp.maximum(x @ w20 + b20, 0.0)
    h2 = jnp.maximum(h2 @ w21 + b21, 0.0)
    q2 = h2 @ wq2 + bq2
    return q1, q2


if __name__ == "__main__":
    key = jax.random.PRNGKey(0)
    k_params, k_states, k_actions = jax.random.split(key, 3)

    batch = 8
    state_dim = 12
    action_dim = 4
    input_dim = state_dim + action_dim  # 16
    hidden_dims = (64, 64)

    params = init_two_handed_net(k_params, input_dim, hidden_dims)
    packed = pack_params(params, state_dim, hidden_dims)   # fp32 (exact numerics)

    states = jax.random.normal(k_states, (batch, state_dim), jnp.float32)
    actions = jax.random.normal(k_actions, (batch, action_dim), jnp.float32)

    q1, q2 = two_handed_net_forward(states, actions, packed)
    jax.block_until_ready((q1, q2))

    # sanity check against the unfused pure-JAX reference
    r1, r2 = reference_forward(states, actions, params)
    assert q1.shape == (batch, 1) and q2.shape == (batch, 1)
    assert jnp.allclose(q1, r1, atol=1e-4, rtol=1e-4)
    assert jnp.allclose(q2, r2, atol=1e-4, rtol=1e-4)

    print("KERNEL_OK")
</pallas_src>

<mosaic_0001>
module attributes {stable_mosaic.version = 11 : i64} {
  func.func @_two_handed_fused_kernel(%arg0: i32, %arg1: memref<8x12xf32, #tpu.memory_space<vmem>>, %arg2: memref<8x4xf32, #tpu.memory_space<vmem>>, %arg3: memref<12x128xf32, #tpu.memory_space<vmem>>, %arg4: memref<4x128xf32, #tpu.memory_space<vmem>>, %arg5: memref<128x128xf32, #tpu.memory_space<vmem>>, %arg6: memref<128x8xf32, #tpu.memory_space<vmem>>, %arg7: memref<2x128xf32, #tpu.memory_space<vmem>>, %arg8: memref<1x8xf32, #tpu.memory_space<vmem>>, %arg9: memref<8x8xf32, #tpu.memory_space<vmem>>) attributes {dimension_semantics = [#tpu.dimension_semantics<parallel>], iteration_bounds = array<i64: 1>, scalar_prefetch = 0 : i64, scratch_operands = 0 : i64, tpu.core_type = #tpu.core_type<tc>, window_params = [{transform_indices = @transform_0, window_bounds = array<i64: 8, 12>}, {transform_indices = @transform_1, window_bounds = array<i64: 8, 4>}, {pipeline_mode = #tpu.pipeline_mode<synchronous>, transform_indices = @transform_2, window_bounds = array<i64: 12, 128>}, {pipeline_mode = #tpu.pipeline_mode<synchronous>, transform_indices = @transform_3, window_bounds = array<i64: 4, 128>}, {pipeline_mode = #tpu.pipeline_mode<synchronous>, transform_indices = @transform_4, window_bounds = array<i64: 128, 128>}, {pipeline_mode = #tpu.pipeline_mode<synchronous>, transform_indices = @transform_5, window_bounds = array<i64: 128, 8>}, {pipeline_mode = #tpu.pipeline_mode<synchronous>, transform_indices = @transform_6, window_bounds = array<i64: 2, 128>}, {pipeline_mode = #tpu.pipeline_mode<synchronous>, transform_indices = @transform_7, window_bounds = array<i64: 1, 8>}, {transform_indices = @transform_8, window_bounds = array<i64: 8, 8>}]} {
    %c0 = arith.constant 0 : index
    %c0_0 = arith.constant 0 : index
    %0 = vector.load %arg1[%c0, %c0_0] : memref<8x12xf32, #tpu.memory_space<vmem>>, vector<8x12xf32>
    %c0_1 = arith.constant 0 : index
    %c0_2 = arith.constant 0 : index
    %1 = vector.load %arg3[%c0_1, %c0_2] : memref<12x128xf32, #tpu.memory_space<vmem>>, vector<12x128xf32>
    %cst = arith.constant dense<0.000000e+00> : vector<8x128xf32>
    %2 = tpu.matmul %0, %1, %cst {dimension_numbers = #tpu.dot_dimension_numbers<[1], [0], [0], [1], [0, 0, 1, 1], [], []>} : vector<8x12xf32>, vector<12x128xf32>, vector<8x128xf32> -> vector<8x128xf32>
    %c0_3 = arith.constant 0 : index
    %c0_4 = arith.constant 0 : index
    %3 = vector.load %arg2[%c0_3, %c0_4] : memref<8x4xf32, #tpu.memory_space<vmem>>, vector<8x4xf32>
    %c0_5 = arith.constant 0 : index
    %c0_6 = arith.constant 0 : index
    %4 = vector.load %arg4[%c0_5, %c0_6] : memref<4x128xf32, #tpu.memory_space<vmem>>, vector<4x128xf32>
    %cst_7 = arith.constant dense<0.000000e+00> : vector<8x128xf32>
    %5 = tpu.matmul %3, %4, %cst_7 {dimension_numbers = #tpu.dot_dimension_numbers<[1], [0], [0], [1], [0, 0, 1, 1], [], []>} : vector<8x4xf32>, vector<4x128xf32>, vector<8x128xf32> -> vector<8x128xf32>
    %6 = arith.addf %2, %5 : vector<8x128xf32>
    %c0_8 = arith.constant 0 : index
    %c0_9 = arith.constant 0 : index
    %7 = vector.load %arg7[%c0_8, %c0_9] : memref<2x128xf32, #tpu.memory_space<vmem>>, vector<1x128xf32>
    %8 = vector.broadcast %7 : vector<1x128xf32> to vector<8x128xf32>
    %9 = arith.addf %6, %8 : vector<8x128xf32>
    %cst_10 = arith.constant 0.000000e+00 : f32
    %10 = vector.broadcast %cst_10 : f32 to vector<8x128xf32>
    %11 = arith.maximumf %9, %10 : vector<8x128xf32>
    %c0_11 = arith.constant 0 : index
    %c0_12 = arith.constant 0 : index
    %12 = vector.load %arg5[%c0_11, %c0_12] : memref<128x128xf32, #tpu.memory_space<vmem>>, vector<128x128xf32>
    %cst_13 = arith.constant dense<0.000000e+00> : vector<8x128xf32>
    %13 = tpu.matmul %11, %12, %cst_13 {dimension_numbers = #tpu.dot_dimension_numbers<[1], [0], [0], [1], [0, 0, 1, 1], [], []>} : vector<8x128xf32>, vector<128x128xf32>, vector<8x128xf32> -> vector<8x128xf32>
    %c1 = arith.constant 1 : index
    %c0_14 = arith.constant 0 : index
    %14 = vector.load %arg7[%c1, %c0_14] : memref<2x128xf32, #tpu.memory_space<vmem>>, vector<1x128xf32>
    %15 = vector.broadcast %14 : vector<1x128xf32> to vector<8x128xf32>
    %16 = arith.addf %13, %15 : vector<8x128xf32>
    %cst_15 = arith.constant 0.000000e+00 : f32
    %17 = vector.broadcast %cst_15 : f32 to vector<8x128xf32>
    %18 = arith.maximumf %16, %17 : vector<8x128xf32>
    %c0_16 = arith.constant 0 : index
    %c0_17 = arith.constant 0 : index
    %19 = vector.load %arg6[%c0_16, %c0_17] : memref<128x8xf32, #tpu.memory_space<vmem>>, vector<128x8xf32>
    %cst_18 = arith.constant dense<0.000000e+00> : vector<8x8xf32>
    %20 = tpu.matmul %18, %19, %cst_18 {dimension_numbers = #tpu.dot_dimension_numbers<[1], [0], [0], [1], [0, 0, 1, 1], [], []>} : vector<8x128xf32>, vector<128x8xf32>, vector<8x8xf32> -> vector<8x8xf32>
    %c0_19 = arith.constant 0 : index
    %c0_20 = arith.constant 0 : index
    %21 = vector.load %arg8[%c0_19, %c0_20] : memref<1x8xf32, #tpu.memory_space<vmem>>, vector<1x8xf32>
    %22 = vector.broadcast %21 : vector<1x8xf32> to vector<8x8xf32>
    %23 = arith.addf %20, %22 : vector<8x8xf32>
    %c0_21 = arith.constant 0 : index
    %c0_22 = arith.constant 0 : index
    %24 = vector.load %arg9[%c0_21, %c0_22] : memref<8x8xf32, #tpu.memory_space<vmem>>, vector<8x8xf32>
    tpu.vector_store %arg9[%c0_21, %c0_22], %23 {strides = array<i32>} : memref<8x8xf32, #tpu.memory_space<vmem>>, vector<8x8xf32>,
    return
  }
  func.func @transform_0(%arg0: i32) -> (i32, i32) {
    %c0_i32 = arith.constant 0 : i32
    %c0_i32_0 = arith.constant 0 : i32
    return %arg0, %c0_i32 : i32, i32
  }
  func.func @transform_1(%arg0: i32) -> (i32, i32) {
    %c0_i32 = arith.constant 0 : i32
    %c0_i32_0 = arith.constant 0 : i32
    return %arg0, %c0_i32 : i32, i32
  }
  func.func @transform_2(%arg0: i32) -> (i32, i32) {
    %c0_i32 = arith.constant 0 : i32
    %c0_i32_0 = arith.constant 0 : i32
    %c0_i32_1 = arith.constant 0 : i32
    return %c0_i32, %c0_i32_0 : i32, i32
  }
  func.func @transform_3(%arg0: i32) -> (i32, i32) {
    %c0_i32 = arith.constant 0 : i32
    %c0_i32_0 = arith.constant 0 : i32
    %c0_i32_1 = arith.constant 0 : i32
    return %c0_i32, %c0_i32_0 : i32, i32
  }
  func.func @transform_4(%arg0: i32) -> (i32, i32) {
    %c0_i32 = arith.constant 0 : i32
    %c0_i32_0 = arith.constant 0 : i32
    %c0_i32_1 = arith.constant 0 : i32
    return %c0_i32, %c0_i32_0 : i32, i32
  }
  func.func @transform_5(%arg0: i32) -> (i32, i32) {
    %c0_i32 = arith.constant 0 : i32
    %c0_i32_0 = arith.constant 0 : i32
    %c0_i32_1 = arith.constant 0 : i32
    return %c0_i32, %c0_i32_0 : i32, i32
  }
  func.func @transform_6(%arg0: i32) -> (i32, i32) {
    %c0_i32 = arith.constant 0 : i32
    %c0_i32_0 = arith.constant 0 : i32
    %c0_i32_1 = arith.constant 0 : i32
    return %c0_i32, %c0_i32_0 : i32, i32
  }
  func.func @transform_7(%arg0: i32) -> (i32, i32) {
    %c0_i32 = arith.constant 0 : i32
    %c0_i32_0 = arith.constant 0 : i32
    %c0_i32_1 = arith.constant 0 : i32
    return %c0_i32, %c0_i32_0 : i32, i32
  }
  func.func @transform_8(%arg0: i32) -> (i32, i32) {
    %c0_i32 = arith.constant 0 : i32
    %c0_i32_0 = arith.constant 0 : i32
    return %arg0, %c0_i32 : i32, i32
  }
}

</mosaic_0001>

<llo_original>
// kernel: two_handed_net_forward.1
$region0: #{two_handed_net_forward.1}
  #allocation0 [shape = 'u32[]', space=smem, size = 0x4, offset = 0x4, fixed_abs, tag = 'smem constant byte address 0x4 - core index']
  #allocation1 [shape = 'u32[72,128]{1,0:T(1,128)}', space=vmem, size = 0x9000, scoped, tag = 'internal scratch']
  %s0 = inlined_call_operand.hbm [shape: f32[8,12], index: 0, kind: input, shape index: {}]
  %s1 = inlined_call_operand.vmem [shape: f32[8,4], index: 1, kind: input, shape index: {}]
  %s2 = inlined_call_operand.vmem [shape: f32[12,128], index: 2, kind: input, shape index: {}]
  %s3 = inlined_call_operand.hbm [shape: f32[4,128], index: 3, kind: input, shape index: {}]
  %s4 = inlined_call_operand.vmem [shape: f32[128,128], index: 4, kind: input, shape index: {}]
  %s5 = inlined_call_operand.vmem [shape: f32[128,8], index: 5, kind: input, shape index: {}]
  %s6 = inlined_call_operand.hbm [shape: f32[2,128], index: 6, kind: input, shape index: {}]
  %s7 = inlined_call_operand.vmem [shape: f32[1,8], index: 7, kind: input, shape index: {}]
  %s8 = inlined_call_operand.vmem [shape: f32[8,8], index: 8, kind: output, shape index: {}]
  %s9 = sld [smem:[#allocation0]]
  $region54: #{two_handed_net_forward.1} parent=0
    _
  %s11 = ssub.s32 1, %s9
  %s12 = scalar_select 0, %s11, %s9
  $region1: #{two_handed_net_forward.1} parent=0
    #allocation2 [shape = 'u8[4096]{0}', space=vmem, size = 0x1000, scoped, tag = 'input window, operand 0, single buffered']
    #allocation3 [shape = 's32[1]{0}', space=sflag, size = 0x4, scoped, tag = 'scoped memory for two_handed_net_forward.1']
    #allocation4 [shape = 'u8[2048]{0}', space=vmem, size = 0x800, scoped, tag = 'input window, operand 3, single buffered']
    #allocation5 [shape = 's32[1]{0}', space=sflag, size = 0x4, scoped, tag = 'scoped memory for two_handed_net_forward.1']
    #allocation6 [shape = 'u8[1024]{0}', space=vmem, size = 0x400, scoped, tag = 'input window, operand 6, single buffered']
    %13 = vsyncpa [#allocation3], 0
    %14 = vsyncpa [#allocation5], 0
    // Predicated region
    $region2: #{two_handed_net_forward.1} parent=1 // pred_check
      _
    $region3: #{two_handed_net_forward.1} parent=1 // pred_check_branch
      %16 = sbr.rel (0) target = $region5
    $region4: #{two_handed_net_forward.1} parent=1 // pred_region
      %18 = vsyncadd [#allocation3], 0
      %s20 = sshll.u32 %s0, 4
      %s21 = int_to_ptr.hbm [resolvable:$true] %s20
      %s22 = sshll.u32 [#allocation2], 4
      %s23 = int_to_ptr.vmem [resolvable:$true] %s22
      %25 = dma.hbm_to_vmem [thread:$0]  %s21, 128, %s23, [#allocation3]
    $region5: #{two_handed_net_forward.1} parent=1 // pred_fallthru
      _
    // Predicated region
    $region6: #{two_handed_net_forward.1} parent=1 // pred_check
      _
    $region7: #{two_handed_net_forward.1} parent=1 // pred_check_branch
      %27 = sbr.rel (0) target = $region9
    $region8: #{two_handed_net_forward.1} parent=1 // pred_region
      _
    $region9: #{two_handed_net_forward.1} parent=1 // pred_fallthru
      _
    // Predicated region
    $region10: #{two_handed_net_forward.1} parent=1 // pred_check
      _
    $region11: #{two_handed_net_forward.1} parent=1 // pred_check_branch
      %29 = sbr.rel (0) target = $region13
    $region12: #{two_handed_net_forward.1} parent=1 // pred_region
      _
    $region13: #{two_handed_net_forward.1} parent=1 // pred_fallthru
      _
    // Predicated region
    $region14: #{two_handed_net_forward.1} parent=1 // pred_check
      _
    $region15: #{two_handed_net_forward.1} parent=1 // pred_check_branch
      %31 = sbr.rel (0) target = $region17
    $region16: #{two_handed_net_forward.1} parent=1 // pred_region
      %33 = vsyncadd [#allocation5], 0
      %s35 = sshll.u32 %s3, 4
      %s36 = int_to_ptr.hbm [resolvable:$true] %s35
      %s37 = sshll.u32 [#allocation4], 4
      %s38 = int_to_ptr.vmem [resolvable:$true] %s37
      %40 = dma.hbm_to_vmem [thread:$0]  %s36, 64, %s38, [#allocation5]
    $region17: #{two_handed_net_forward.1} parent=1 // pred_fallthru
      _
    // Predicated region
    $region18: #{two_handed_net_forward.1} parent=1 // pred_check
      _
    $region19: #{two_handed_net_forward.1} parent=1 // pred_check_branch
      %42 = sbr.rel (0) target = $region21
    $region20: #{two_handed_net_forward.1} parent=1 // pred_region
      _
    $region21: #{two_handed_net_forward.1} parent=1 // pred_fallthru
      _
    // Predicated region
    $region22: #{two_handed_net_forward.1} parent=1 // pred_check
      _
    $region23: #{two_handed_net_forward.1} parent=1 // pred_check_branch
      %44 = sbr.rel (0) target = $region25
    $region24: #{two_handed_net_forward.1} parent=1 // pred_region
      _
    $region25: #{two_handed_net_forward.1} parent=1 // pred_fallthru
      _
    // Predicated region
    $region26: #{two_handed_net_forward.1} parent=1 // pred_check
      _
    $region27: #{two_handed_net_forward.1} parent=1 // pred_check_branch
      %46 = sbr.rel (0) target = $region29
    $region28: #{two_handed_net_forward.1} parent=1 // pred_region
      %48 = vsyncadd [#allocation5], 0
      %s50 = sshll.u32 %s6, 4
      %s51 = int_to_ptr.hbm [resolvable:$true] %s50
      %s52 = sshll.u32 [#allocation6], 4
      %s53 = int_to_ptr.vmem [resolvable:$true] %s52
      %55 = dma.hbm_to_vmem [thread:$0]  %s51, 32, %s53, [#allocation5]
    $region29: #{two_handed_net_forward.1} parent=1 // pred_fallthru
      _
    // Predicated region
    $region30: #{two_handed_net_forward.1} parent=1 // pred_check
      _
    $region31: #{two_handed_net_forward.1} parent=1 // pred_check_branch
      %57 = sbr.rel (0) target = $region33
    $region32: #{two_handed_net_forward.1} parent=1 // pred_region
      _
    $region33: #{two_handed_net_forward.1} parent=1 // pred_fallthru
      _
    // Predicated region
    $region34: #{two_handed_net_forward.1} parent=1 // pred_check
      _
    $region35: #{two_handed_net_forward.1} parent=1 // pred_check_branch
      %59 = sbr.rel (0) target = $region37
    $region36: #{two_handed_net_forward.1} parent=1 // pred_region
      %61 = dma.done [#allocation3], 128
    $region37: #{two_handed_net_forward.1} parent=1 // pred_fallthru
      _
    // Predicated region
    $region38: #{two_handed_net_forward.1} parent=1 // pred_check
      _
    $region39: #{two_handed_net_forward.1} parent=1 // pred_check_branch
      %63 = sbr.rel (0) target = $region41
    $region40: #{two_handed_net_forward.1} parent=1 // pred_region
      %65 = dma.done [#allocation5], 64
    $region41: #{two_handed_net_forward.1} parent=1 // pred_fallthru
      _
    // Predicated region
    $region42: #{two_handed_net_forward.1} parent=1 // pred_check
      _
    $region43: #{two_handed_net_forward.1} parent=1 // pred_check_branch
      %67 = sbr.rel (0) target = $region45
    $region44: #{two_handed_net_forward.1} parent=1 // pred_region
      %69 = dma.done [#allocation5], 32
    $region45: #{two_handed_net_forward.1} parent=1 // pred_fallthru
      _
    %v70 = vld [vmem:[#allocation2] sm:$0xff]
    %v71 = vld [vmem:[%s2] sm:$0xff]
    %v72 = vld [vmem:[%s2 + $0x8] sm:$0xf]
    %v73 = vld [vmem:[%s1] sm:$0xff]
    %v74 = vld [vmem:[#allocation4] sm:$0xf]
    %vm75 = vcmask 31744
    %v77 = vsel %vm75, %v73, 0
    %vm79 = vcmask 1043456
    %v81 = vsel %vm79, %v74, 0
    %83 = vmatpush.msra.mxu0 0.0
    %84 = vmatpush.msra.mxu0 0.0
    %85 = vmatpush.msra.mxu0 0.0
    %86 = vmatpush.msra.mxu0 0.0
    %87 = vmatpush.msra.mxu0 0.0
    %88 = vmatpush.msra.mxu0 0.0
    %89 = vmatpush.msra.mxu0 0.0
    %90 = vmatpush.msra.mxu0 0.0
    %91 = vmatpush.msra.mxu0 0.0
    %92 = vmatpush.msra.mxu0 0.0
    %93 = vmatpush.msra.mxu0 0.0
    %94 = vmatpush.msra.mxu0 0.0
    %95 = vmatpush.msra.mxu0 0.0
    %96 = vmatpush.msra.mxu0 0.0
    %97 = vmatpush.msra.mxu0 0.0
    %98 = vmatpush.msra.mxu0 %v81
    %99 = vmatmul.f32.gmra.mxu0 %v77
    %v100 = vpop.f32.mrf.mxu0
    %v101 = vadd.f32 0.0, %v100
    %102 = vdwg.mxu0
    %vm103 = vcmask 97280
    %v105 = vsel %vm103, %v70, 0
    %v108 = vsel %vm79, %v72, 0
    %110 = vmatpush.msra.mxu0 0.0
    %111 = vmatpush.msra.mxu0 0.0
    %112 = vmatpush.msra.mxu0 0.0
    %113 = vmatpush.msra.mxu0 0.0
    %114 = vmatpush.msra.mxu0 0.0
    %115 = vmatpush.msra.mxu0 0.0
    %116 = vmatpush.msra.mxu0 0.0
    %117 = vmatpush.msra.mxu0 0.0
    %118 = vmatpush.msra.mxu0 0.0
    %119 = vmatpush.msra.mxu0 0.0
    %120 = vmatpush.msra.mxu0 0.0
    %121 = vmatpush.msra.mxu0 0.0
    %122 = vmatpush.msra.mxu0 0.0
    %123 = vmatpush.msra.mxu0 0.0
    %124 = vmatpush.msra.mxu0 %v108
    %125 = vmatpush.msra.mxu0 %v71
    %126 = vmatmul.f32.gmra.mxu0 %v105
    %v127 = vpop.f32.mrf.mxu0
    %v128 = vadd.f32 %v101, %v127
    %129 = vdwg.mxu0
    %v130 = vld [vmem:[#allocation6] sm:$0x1]
    %v131 = vperm.slane %v130, 0
    %v132 = vadd.f32 %v128, %v131
    %v133 = vmax.f32 %v132, 0.0
    %v134 = vld [vmem:[%s4] sm:$0xff]
    %v135 = vld [vmem:[%s4 + $0x8] sm:$0xff]
    %v136 = vld [vmem:[%s4 + $0x10] sm:$0xff]
    %v137 = vld [vmem:[%s4 + $0x18] sm:$0xff]
    %v138 = vld [vmem:[%s4 + $0x20] sm:$0xff]
    %v139 = vld [vmem:[%s4 + $0x28] sm:$0xff]
    %v140 = vld [vmem:[%s4 + $0x30] sm:$0xff]
    %v141 = vld [vmem:[%s4 + $0x38] sm:$0xff]
    %v142 = vld [vmem:[%s4 + $0x40] sm:$0xff]
    %v143 = vld [vmem:[%s4 + $0x48] sm:$0xff]
    %v144 = vld [vmem:[%s4 + $0x50] sm:$0xff]
    %v145 = vld [vmem:[%s4 + $0x58] sm:$0xff]
    %v146 = vld [vmem:[%s4 + $0x60] sm:$0xff]
    %v147 = vld [vmem:[%s4 + $0x68] sm:$0xff]
    %v148 = vld [vmem:[%s4 + $0x70] sm:$0xff]
    %v149 = vld [vmem:[%s4 + $0x78] sm:$0xff]
    %v150 = vld [vmem:[#allocation6 + $0x1] sm:$0x1]
    %v151 = vperm.slane %v150, 0
    %152 = vmatpush.msra.mxu0 %v149
    %153 = vmatpush.msra.mxu0 %v148
    %154 = vmatpush.msra.mxu0 %v147
    %155 = vmatpush.msra.mxu0 %v146
    %156 = vmatpush.msra.mxu0 %v145
    %157 = vmatpush.msra.mxu0 %v144
    %158 = vmatpush.msra.mxu0 %v143
    %159 = vmatpush.msra.mxu0 %v142
    %160 = vmatpush.msra.mxu0 %v141
    %161 = vmatpush.msra.mxu0 %v140
    %162 = vmatpush.msra.mxu0 %v139
    %163 = vmatpush.msra.mxu0 %v138
    %164 = vmatpush.msra.mxu0 %v137
    %165 = vmatpush.msra.mxu0 %v136
    %166 = vmatpush.msra.mxu0 %v135
    %167 = vmatpush.msra.mxu0 %v134
    %168 = vmatmul.f32.gmra.mxu0 %v133
    %v169 = vpop.f32.mrf.mxu0
    %v170 = vadd.f32 %v151, %v169
    %171 = vdwg.mxu0
    %v172 = vmax.f32 %v170, 0.0
    %v173 = vld [vmem:[%s5] sm:$0xff]
    %v174 = vld [vmem:[%s5 + $0x8] sm:$0xff]
    %v175 = vld [vmem:[%s5 + $0x10] sm:$0xff]
    %v176 = vld [vmem:[%s5 + $0x18] sm:$0xff]
    %v177 = vld [vmem:[%s5 + $0x20] sm:$0xff]
    %v178 = vld [vmem:[%s5 + $0x28] sm:$0xff]
    %v179 = vld [vmem:[%s5 + $0x30] sm:$0xff]
    %v180 = vld [vmem:[%s5 + $0x38] sm:$0xff]
    %v181 = vld [vmem:[%s5 + $0x40] sm:$0xff]
    %v182 = vld [vmem:[%s5 + $0x48] sm:$0xff]
    %v183 = vld [vmem:[%s5 + $0x50] sm:$0xff]
    %v184 = vld [vmem:[%s5 + $0x58] sm:$0xff]
    %v185 = vld [vmem:[%s5 + $0x60] sm:$0xff]
    %v186 = vld [vmem:[%s5 + $0x68] sm:$0xff]
    %v187 = vld [vmem:[%s5 + $0x70] sm:$0xff]
    %v188 = vld [vmem:[%s5 + $0x78] sm:$0xff]
    %v189 = vld [vmem:[%s7] sm:$0x1]
    %v191 = vperm.slane %v189, 0
    %193 = vmatpush.msra.mxu0 %v188
    %194 = vmatpush.msra.mxu0 %v187
    %195 = vmatpush.msra.mxu0 %v186
    %196 = vmatpush.msra.mxu0 %v185
    %197 = vmatpush.msra.mxu0 %v184
    %198 = vmatpush.msra.mxu0 %v183
    %199 = vmatpush.msra.mxu0 %v182
    %200 = vmatpush.msra.mxu0 %v181
    %201 = vmatpush.msra.mxu0 %v180
    %202 = vmatpush.msra.mxu0 %v179
    %203 = vmatpush.msra.mxu0 %v178
    %204 = vmatpush.msra.mxu0 %v177
    %205 = vmatpush.msra.mxu0 %v176
    %206 = vmatpush.msra.mxu0 %v175
    %207 = vmatpush.msra.mxu0 %v174
    %208 = vmatpush.msra.mxu0 %v173
    %209 = vmatmul.f32.gmra.mxu0 %v172
    %v210 = vpop.f32.mrf.mxu0
    %v211 = vadd.f32 %v191, %v210
    %212 = vdwg.mxu0
    %vm213 = vcmask 64512
    %214 = vst.msk [vmem:[%s8] sm:$0xff] %vm213, %v211
    // Predicated region
    $region46: #{two_handed_net_forward.1} parent=1 // pred_check
      _
    $region47: #{two_handed_net_forward.1} parent=1 // pred_check_branch
      %216 = sbr.rel (0) target = $region49
    $region48: #{two_handed_net_forward.1} parent=1 // pred_region
      _
    $region49: #{two_handed_net_forward.1} parent=1 // pred_fallthru
      _
    // Predicated region
    $region50: #{two_handed_net_forward.1} parent=1 // pred_check
      _
    $region51: #{two_handed_net_forward.1} parent=1 // pred_check_branch
      %218 = sbr.rel (0) target = $region53
    $region52: #{two_handed_net_forward.1} parent=1 // pred_region
      _
    $region53: #{two_handed_net_forward.1} parent=1 // pred_fallthru
      _
    %219 = vsyncpa [#allocation3], 1
    %220 = vsyncpa [#allocation5], 1

</llo_original>
